<compile_context>
chip_gen: v5e
topology: v5e:2x2
jax: 0.10.0
libtpu: 0.0.40
codegen_flags: <defaults>
</compile_context>

<pallas_src>
import jax
import jax.numpy as jnp
import numpy as np
from jax.experimental import pallas as pl
from jax.experimental.pallas import tpu as pltpu

ARCH = [2, 0, 3]   # fixed architecture realized by this kernel
LANE = 128         # node axis is padded to a multiple of the lane width


def model_kernel(xT_ref, aT_nor_ref, aT_com_ref,
                 wT_pre_ref, b_pre_ref,
                 wT_mlp_ref, b_mlp_ref,
                 wT_cls_ref, b_cls_ref,
                 g_ref, out_ref):
    # Everything is transposed: activations are [feature, node_pad] so the
    # padded node count (128) is the MXU output / lane dimension throughout.

    # preprocess0 (MLP, last=True): dropout(identity in eval) + Linear(feat->hid)
    h0 = jnp.dot(wT_pre_ref[...], xT_ref[...],
                 preferred_element_type=jnp.float32) + b_pre_ref[...]

    # op0: Graph(adj_nor):  (adj @ h)^T = h^T @ adj^T
    p1 = jnp.dot(h0.astype(jnp.bfloat16), aT_nor_ref[...],
                 preferred_element_type=jnp.float32)

    # gated aggregation of tempP = [h0, p1] with sigmoid(gate[0]), sigmoid(gate[1])
    m = g_ref[0] * h0 + g_ref[1] * p1

    # op1: MLP(hid, hid), not last -> relu(Linear(x))
    t1 = jnp.dot(wT_mlp_ref[...], m.astype(jnp.bfloat16),
                 preferred_element_type=jnp.float32) + b_mlp_ref[...]
    t1 = jnp.maximum(t1, 0.0)

    # op2: Graph(adj_com)
    q1 = jnp.dot(t1.astype(jnp.bfloat16), aT_com_ref[...],
                 preferred_element_type=jnp.float32)

    # classifier (sigmoid(gate[2]) already folded into wT_cls in the wrapper)
    logits = jnp.dot(wT_cls_ref[...], q1.astype(jnp.bfloat16),
                     preferred_element_type=jnp.float32) + b_cls_ref[...]

    # log_softmax over classes (sublane axis), f32
    mx = jnp.max(logits, axis=0, keepdims=True)
    shifted = logits - mx
    lse = jnp.log(jnp.sum(jnp.exp(shifted), axis=0, keepdims=True))
    out_ref[...] = shifted - lse


def model_forward(s0, a_nor, a_com, params):
    N, F = s0.shape
    hid = params["w_pre"].shape[1]
    C = params["w_cls"].shape[1]
    n_pad = max(LANE, ((N + LANE - 1) // LANE) * LANE)

    g = jax.nn.sigmoid(params["gate"]).astype(jnp.float32)

    # Transpose + zero-pad the node axis to the lane width; bf16 MXU operands.
    xT = jnp.zeros((F, n_pad), jnp.bfloat16).at[:, :N].set(
        s0.T.astype(jnp.bfloat16))
    aT_nor = jnp.zeros((n_pad, n_pad), jnp.bfloat16).at[:N, :N].set(
        a_nor.T.astype(jnp.bfloat16))
    aT_com = jnp.zeros((n_pad, n_pad), jnp.bfloat16).at[:N, :N].set(
        a_com.T.astype(jnp.bfloat16))

    wT_pre = params["w_pre"].T.astype(jnp.bfloat16)            # [hid, F]
    b_pre = params["b_pre"].reshape(hid, 1).astype(jnp.float32)
    wT_mlp = params["w_mlp"].T.astype(jnp.bfloat16)            # [hid, hid]
    b_mlp = params["b_mlp"].reshape(hid, 1).astype(jnp.float32)
    # fold final gate sigmoid(gate[2]) into the tiny classifier weight
    wT_cls = (g[2] * params["w_cls"].T).astype(jnp.bfloat16)   # [C, hid]
    b_cls = params["b_cls"].reshape(C, 1).astype(jnp.float32)

    vmem = pl.BlockSpec(memory_space=pltpu.MemorySpace.VMEM)
    smem = pl.BlockSpec(memory_space=pltpu.MemorySpace.SMEM)

    outT = pl.pallas_call(
        model_kernel,
        out_shape=jax.ShapeDtypeStruct((C, n_pad), jnp.float32),
        in_specs=[vmem] * 9 + [smem],
        out_specs=vmem,
        compiler_params=pltpu.CompilerParams(
            vmem_limit_bytes=32 * 1024 * 1024),
    )(xT, aT_nor, aT_com,
      wT_pre, b_pre, wT_mlp, b_mlp, wT_cls, b_cls,
      g[:2])

    # back to PyTorch layout [N, num_classes]; drop padded node columns
    return outT[:, :N].T


def model_reference(s0, a_nor, a_com, params):
    """Pure-JAX f32 reference of the same forward pass (for verification)."""
    g = jax.nn.sigmoid(params["gate"])
    h0 = s0 @ params["w_pre"] + params["b_pre"]
    p1 = a_nor @ h0
    m = g[0] * h0 + g[1] * p1
    t1 = jax.nn.relu(m @ params["w_mlp"] + params["b_mlp"])
    q1 = a_com @ t1
    r = g[2] * q1
    logits = r @ params["w_cls"] + params["b_cls"]
    return jax.nn.log_softmax(logits, axis=1)


def make_adjacencies(n):
    """Deterministic synthetic graph: ring + self loops."""
    a = np.eye(n, dtype=np.float32)
    for i in range(n):
        a[i, (i + 1) % n] = 1.0
        a[i, (i - 1) % n] = 1.0
    deg = a.sum(axis=1)
    d_inv_sqrt = 1.0 / np.sqrt(deg)
    adj_nor = (a * d_inv_sqrt[:, None]) * d_inv_sqrt[None, :]   # sym-normalized
    adj_com = a / deg[:, None]                                  # row-normalized
    return jnp.asarray(adj_nor), jnp.asarray(adj_com)


def init_params(key, feat_dim, hid_dim, num_classes):
    ks = jax.random.split(key, 7)
    scale = 0.1
    params = {
        "w_pre": scale * jax.random.normal(ks[0], (feat_dim, hid_dim), jnp.float32),
        "b_pre": scale * jax.random.normal(ks[1], (1, hid_dim), jnp.float32),
        "w_mlp": scale * jax.random.normal(ks[2], (hid_dim, hid_dim), jnp.float32),
        "b_mlp": scale * jax.random.normal(ks[3], (1, hid_dim), jnp.float32),
        "w_cls": scale * jax.random.normal(ks[4], (hid_dim, num_classes), jnp.float32),
        "b_cls": scale * jax.random.normal(ks[5], (1, num_classes), jnp.float32),
        # gate = 1e-5 * randn(numP) with numP = 3 for ARCH = [2, 0, 3]
        "gate": 1e-5 * jax.random.normal(ks[6], (3,), jnp.float32),
    }
    return params


if __name__ == "__main__":
    N, FEAT, HID, NUM_CLASSES = 8, 16, 32, 4

    key = jax.random.PRNGKey(0)
    k_x, k_p = jax.random.split(key)

    s0 = jax.random.normal(k_x, (N, FEAT), jnp.float32)
    adj_nor, adj_com = make_adjacencies(N)
    params = init_params(k_p, FEAT, HID, NUM_CLASSES)

    out = model_forward(s0, adj_nor, adj_com, params)
    out = jax.block_until_ready(out)

    # bf16 MXU operands -> compare against the f32 reference with bf16-level tolerance
    ref = model_reference(s0, adj_nor, adj_com, params)
    np.testing.assert_allclose(np.asarray(out), np.asarray(ref), rtol=2e-2, atol=2e-2)

    print("KERNEL_OK")
</pallas_src>

<mosaic_0001>
module attributes {stable_mosaic.version = 11 : i64} {
  func.func @model_kernel(%arg0: memref<16x128xbf16, #tpu.memory_space<vmem>>, %arg1: memref<128x128xbf16, #tpu.memory_space<vmem>>, %arg2: memref<128x128xbf16, #tpu.memory_space<vmem>>, %arg3: memref<32x16xbf16, #tpu.memory_space<vmem>>, %arg4: memref<32x1xf32, #tpu.memory_space<vmem>>, %arg5: memref<32x32xbf16, #tpu.memory_space<vmem>>, %arg6: memref<32x1xf32, #tpu.memory_space<vmem>>, %arg7: memref<4x32xbf16, #tpu.memory_space<vmem>>, %arg8: memref<4x1xf32, #tpu.memory_space<vmem>>, %arg9: memref<2xf32, #tpu.memory_space<smem>>, %arg10: memref<4x128xf32, #tpu.memory_space<vmem>>) attributes {dimension_semantics = [], scalar_prefetch = 0 : i64, scratch_operands = 0 : i64, tpu.core_type = #tpu.core_type<tc>} {
    %c0 = arith.constant 0 : index
    %c0_0 = arith.constant 0 : index
    %0 = vector.load %arg3[%c0, %c0_0] : memref<32x16xbf16, #tpu.memory_space<vmem>>, vector<32x16xbf16>
    %c0_1 = arith.constant 0 : index
    %c0_2 = arith.constant 0 : index
    %1 = vector.load %arg0[%c0_1, %c0_2] : memref<16x128xbf16, #tpu.memory_space<vmem>>, vector<16x128xbf16>
    %cst = arith.constant dense<0.000000e+00> : vector<32x128xf32>
    %2 = tpu.matmul %0, %1, %cst {dimension_numbers = #tpu.dot_dimension_numbers<[1], [0], [0], [1], [0, 0, 1, 1], [], []>} : vector<32x16xbf16>, vector<16x128xbf16>, vector<32x128xf32> -> vector<32x128xf32>
    %c0_3 = arith.constant 0 : index
    %c0_4 = arith.constant 0 : index
    %3 = vector.load %arg4[%c0_3, %c0_4] : memref<32x1xf32, #tpu.memory_space<vmem>>, vector<32x1xf32>
    %4 = vector.broadcast %3 : vector<32x1xf32> to vector<32x128xf32>
    %5 = arith.addf %2, %4 : vector<32x128xf32>
    %6 = arith.truncf %5 : vector<32x128xf32> to vector<32x128xbf16>
    %c0_5 = arith.constant 0 : index
    %c0_6 = arith.constant 0 : index
    %7 = vector.load %arg1[%c0_5, %c0_6] : memref<128x128xbf16, #tpu.memory_space<vmem>>, vector<128x128xbf16>
    %cst_7 = arith.constant dense<0.000000e+00> : vector<32x128xf32>
    %8 = tpu.matmul %6, %7, %cst_7 {dimension_numbers = #tpu.dot_dimension_numbers<[1], [0], [0], [1], [0, 0, 1, 1], [], []>} : vector<32x128xbf16>, vector<128x128xbf16>, vector<32x128xf32> -> vector<32x128xf32>
    %c0_8 = arith.constant 0 : index
    %9 = memref.load %arg9[%c0_8] : memref<2xf32, #tpu.memory_space<smem>>
    %10 = vector.broadcast %9 : f32 to vector<32x128xf32>
    %11 = arith.mulf %10, %5 : vector<32x128xf32>
    %c1 = arith.constant 1 : index
    %12 = memref.load %arg9[%c1] : memref<2xf32, #tpu.memory_space<smem>>
    %13 = vector.broadcast %12 : f32 to vector<32x128xf32>
    %14 = arith.mulf %13, %8 : vector<32x128xf32>
    %15 = arith.addf %11, %14 : vector<32x128xf32>
    %c0_9 = arith.constant 0 : index
    %c0_10 = arith.constant 0 : index
    %16 = vector.load %arg5[%c0_9, %c0_10] : memref<32x32xbf16, #tpu.memory_space<vmem>>, vector<32x32xbf16>
    %17 = arith.truncf %15 : vector<32x128xf32> to vector<32x128xbf16>
    %cst_11 = arith.constant dense<0.000000e+00> : vector<32x128xf32>
    %18 = tpu.matmul %16, %17, %cst_11 {dimension_numbers = #tpu.dot_dimension_numbers<[1], [0], [0], [1], [0, 0, 1, 1], [], []>} : vector<32x32xbf16>, vector<32x128xbf16>, vector<32x128xf32> -> vector<32x128xf32>
    %c0_12 = arith.constant 0 : index
    %c0_13 = arith.constant 0 : index
    %19 = vector.load %arg6[%c0_12, %c0_13] : memref<32x1xf32, #tpu.memory_space<vmem>>, vector<32x1xf32>
    %20 = vector.broadcast %19 : vector<32x1xf32> to vector<32x128xf32>
    %21 = arith.addf %18, %20 : vector<32x128xf32>
    %cst_14 = arith.constant 0.000000e+00 : f32
    %22 = vector.broadcast %cst_14 : f32 to vector<32x128xf32>
    %23 = arith.maximumf %21, %22 : vector<32x128xf32>
    %24 = arith.truncf %23 : vector<32x128xf32> to vector<32x128xbf16>
    %c0_15 = arith.constant 0 : index
    %c0_16 = arith.constant 0 : index
    %25 = vector.load %arg2[%c0_15, %c0_16] : memref<128x128xbf16, #tpu.memory_space<vmem>>, vector<128x128xbf16>
    %cst_17 = arith.constant dense<0.000000e+00> : vector<32x128xf32>
    %26 = tpu.matmul %24, %25, %cst_17 {dimension_numbers = #tpu.dot_dimension_numbers<[1], [0], [0], [1], [0, 0, 1, 1], [], []>} : vector<32x128xbf16>, vector<128x128xbf16>, vector<32x128xf32> -> vector<32x128xf32>
    %c0_18 = arith.constant 0 : index
    %c0_19 = arith.constant 0 : index
    %27 = vector.load %arg7[%c0_18, %c0_19] : memref<4x32xbf16, #tpu.memory_space<vmem>>, vector<4x32xbf16>
    %28 = arith.truncf %26 : vector<32x128xf32> to vector<32x128xbf16>
    %cst_20 = arith.constant dense<0.000000e+00> : vector<4x128xf32>
    %29 = tpu.matmul %27, %28, %cst_20 {dimension_numbers = #tpu.dot_dimension_numbers<[1], [0], [0], [1], [0, 0, 1, 1], [], []>} : vector<4x32xbf16>, vector<32x128xbf16>, vector<4x128xf32> -> vector<4x128xf32>
    %c0_21 = arith.constant 0 : index
    %c0_22 = arith.constant 0 : index
    %30 = vector.load %arg8[%c0_21, %c0_22] : memref<4x1xf32, #tpu.memory_space<vmem>>, vector<4x1xf32>
    %31 = vector.broadcast %30 : vector<4x1xf32> to vector<4x128xf32>
    %32 = arith.addf %29, %31 : vector<4x128xf32>
    %cst_23 = arith.constant dense<0xFF800000> : vector<128xf32>
    %33 = vector.multi_reduction <maximumf>, %32, %cst_23 [0] : vector<4x128xf32> to vector<128xf32>
    %34 = vector.shape_cast %33 : vector<128xf32> to vector<1x128xf32>
    %35 = vector.broadcast %34 : vector<1x128xf32> to vector<4x128xf32>
    %36 = arith.subf %32, %35 : vector<4x128xf32>
    %37 = math.exp %36 : vector<4x128xf32>
    %cst_24 = arith.constant dense<0.000000e+00> : vector<128xf32>
    %38 = vector.multi_reduction <add>, %37, %cst_24 [0] : vector<4x128xf32> to vector<128xf32>
    %39 = vector.shape_cast %38 : vector<128xf32> to vector<1x128xf32>
    %40 = math.log %39 : vector<1x128xf32>
    %41 = vector.broadcast %40 : vector<1x128xf32> to vector<4x128xf32>
    %42 = arith.subf %36, %41 : vector<4x128xf32>
    %c0_25 = arith.constant 0 : index
    %c0_26 = arith.constant 0 : index
    %43 = vector.load %arg10[%c0_25, %c0_26] : memref<4x128xf32, #tpu.memory_space<vmem>>, vector<4x128xf32>
    tpu.vector_store %arg10[%c0_25, %c0_26], %42 {strides = array<i32>} : memref<4x128xf32, #tpu.memory_space<vmem>>, vector<4x128xf32>,
    return
  }
}

</mosaic_0001>

<llo_original>
// kernel: tpu_custom_call.1
$region0: #{tpu_custom_call.1}
  #allocation0 [shape = 'u32[]', space=smem, size = 0x4, offset = 0x4, fixed_abs, tag = 'smem constant byte address 0x4 - core index']
  #allocation1 [shape = 'u32[72,128]{1,0:T(1,128)}', space=vmem, size = 0x9000, scoped, tag = 'internal scratch']
  %s0 = inlined_call_operand.vmem [shape: bf16[16,128], index: 0, kind: input, shape index: {}]
  %s1 = inlined_call_operand.vmem [shape: bf16[128,128], index: 1, kind: input, shape index: {}]
  %s2 = inlined_call_operand.hbm [shape: bf16[128,128], index: 2, kind: input, shape index: {}]
  %s3 = inlined_call_operand.vmem [shape: bf16[32,16], index: 3, kind: input, shape index: {}]
  %s4 = inlined_call_operand.vmem [shape: f32[32,1], index: 4, kind: input, shape index: {}]
  %s5 = inlined_call_operand.vmem [shape: bf16[32,32], index: 5, kind: input, shape index: {}]
  %s6 = inlined_call_operand.vmem [shape: f32[32,1], index: 6, kind: input, shape index: {}]
  %s7 = inlined_call_operand.vmem [shape: bf16[4,32], index: 7, kind: input, shape index: {}]
  %s8 = inlined_call_operand.vmem [shape: f32[4,1], index: 8, kind: input, shape index: {}]
  %s9 = inlined_call_operand.vmem [shape: f32[2], index: 9, kind: input, shape index: {}]
  %s10 = inlined_call_operand.hbm [shape: f32[4,128], index: 10, kind: output, shape index: {}]
  %s11 = sld [smem:[#allocation0]]
  $region58: #{tpu_custom_call.1} parent=0
    _
  %s13 = ssub.s32 1, %s11
  %s14 = scalar_select 0, %s13, %s11
  $region1: #{tpu_custom_call.1} parent=0
    #allocation2 [shape = 'u8[32768]{0}', space=vmem, size = 0x8000, scoped, tag = 'input window, operand 2, single buffered']
    #allocation3 [shape = 's32[1]{0}', space=sflag, size = 0x4, scoped, tag = 'scoped memory for tpu_custom_call.1']
    #allocation4 [shape = 's32[1]{0}', space=sflag, size = 0x4, scoped, tag = 'scoped memory for tpu_custom_call.1']
    #allocation5 [shape = 's32[1]{0}', space=sflag, size = 0x4, scoped, tag = 'scoped memory for tpu_custom_call.1']
    #allocation6 [shape = 'u8[512]{0}', space=smem, size = 0x200, scoped, tag = 'input window, operand 9, single buffered']
    #allocation7 [shape = 'u8[2048]{0}', space=vmem, size = 0x800, scoped, tag = 'output window, operand 0, single buffered']
    %15 = vsyncpa [#allocation3], 0
    %16 = vsyncpa [#allocation5], 0
    %17 = vsyncpa [#allocation4], 0
    // Predicated region
    $region2: #{tpu_custom_call.1} parent=1 // pred_check
      _
    $region3: #{tpu_custom_call.1} parent=1 // pred_check_branch
      %19 = sbr.rel (0) target = $region5
    $region4: #{tpu_custom_call.1} parent=1 // pred_region
      _
    $region5: #{tpu_custom_call.1} parent=1 // pred_fallthru
      _
    // Predicated region
    $region6: #{tpu_custom_call.1} parent=1 // pred_check
      _
    $region7: #{tpu_custom_call.1} parent=1 // pred_check_branch
      %21 = sbr.rel (0) target = $region9
    $region8: #{tpu_custom_call.1} parent=1 // pred_region
      _
    $region9: #{tpu_custom_call.1} parent=1 // pred_fallthru
      _
    // Predicated region
    $region10: #{tpu_custom_call.1} parent=1 // pred_check
      _
    $region11: #{tpu_custom_call.1} parent=1 // pred_check_branch
      %23 = sbr.rel (0) target = $region13
    $region12: #{tpu_custom_call.1} parent=1 // pred_region
      %25 = vsyncadd [#allocation3], 0
      %s26 = sshll.u32 %s2, 4
      %s27 = int_to_ptr.hbm [resolvable:$true] %s26
      %s28 = sshll.u32 [#allocation2], 4
      %s29 = int_to_ptr.vmem [resolvable:$true] %s28
      %34 = dma.hbm_to_vmem [thread:$0]  %s27, 1024, %s29, [#allocation3], 64, 64, 4
    $region13: #{tpu_custom_call.1} parent=1 // pred_fallthru
      _
    // Predicated region
    $region14: #{tpu_custom_call.1} parent=1 // pred_check
      _
    $region15: #{tpu_custom_call.1} parent=1 // pred_check_branch
      %36 = sbr.rel (0) target = $region17
    $region16: #{tpu_custom_call.1} parent=1 // pred_region
      _
    $region17: #{tpu_custom_call.1} parent=1 // pred_fallthru
      _
    // Predicated region
    $region18: #{tpu_custom_call.1} parent=1 // pred_check
      _
    $region19: #{tpu_custom_call.1} parent=1 // pred_check_branch
      %38 = sbr.rel (0) target = $region21
    $region20: #{tpu_custom_call.1} parent=1 // pred_region
      _
    $region21: #{tpu_custom_call.1} parent=1 // pred_fallthru
      _
    // Predicated region
    $region22: #{tpu_custom_call.1} parent=1 // pred_check
      _
    $region23: #{tpu_custom_call.1} parent=1 // pred_check_branch
      %40 = sbr.rel (0) target = $region25
    $region24: #{tpu_custom_call.1} parent=1 // pred_region
      _
    $region25: #{tpu_custom_call.1} parent=1 // pred_fallthru
      _
    // Predicated region
    $region26: #{tpu_custom_call.1} parent=1 // pred_check
      _
    $region27: #{tpu_custom_call.1} parent=1 // pred_check_branch
      %42 = sbr.rel (0) target = $region29
    $region28: #{tpu_custom_call.1} parent=1 // pred_region
      _
    $region29: #{tpu_custom_call.1} parent=1 // pred_fallthru
      _
    // Predicated region
    $region30: #{tpu_custom_call.1} parent=1 // pred_check
      _
    $region31: #{tpu_custom_call.1} parent=1 // pred_check_branch
      %44 = sbr.rel (0) target = $region33
    $region32: #{tpu_custom_call.1} parent=1 // pred_region
      _
    $region33: #{tpu_custom_call.1} parent=1 // pred_fallthru
      _
    // Predicated region
    $region34: #{tpu_custom_call.1} parent=1 // pred_check
      _
    $region35: #{tpu_custom_call.1} parent=1 // pred_check_branch
      %46 = sbr.rel (0) target = $region37
    $region36: #{tpu_custom_call.1} parent=1 // pred_region
      _
    $region37: #{tpu_custom_call.1} parent=1 // pred_fallthru
      _
    // Predicated region
    $region38: #{tpu_custom_call.1} parent=1 // pred_check
      _
    $region39: #{tpu_custom_call.1} parent=1 // pred_check_branch
      %48 = sbr.rel (0) target = $region41
    $region40: #{tpu_custom_call.1} parent=1 // pred_region
      %50 = vsyncadd [#allocation5], 0
      %s52 = sshll.u32 %s9, 4
      %s53 = int_to_ptr.vmem [resolvable:$true] %s52
      %55 = dma.vmem_to_smem %s53, 16, [#allocation6], [#allocation5]
    $region41: #{tpu_custom_call.1} parent=1 // pred_fallthru
      _
    // Predicated region
    $region42: #{tpu_custom_call.1} parent=1 // pred_check
      _
    $region43: #{tpu_custom_call.1} parent=1 // pred_check_branch
      %57 = sbr.rel (0) target = $region45
    $region44: #{tpu_custom_call.1} parent=1 // pred_region
      %59 = dma.done [#allocation3], 1024
    $region45: #{tpu_custom_call.1} parent=1 // pred_fallthru
      _
    // Predicated region
    $region46: #{tpu_custom_call.1} parent=1 // pred_check
      _
    $region47: #{tpu_custom_call.1} parent=1 // pred_check_branch
      %61 = sbr.rel (0) target = $region49
    $region48: #{tpu_custom_call.1} parent=1 // pred_region
      %63 = dma.done [#allocation5], 16
    $region49: #{tpu_custom_call.1} parent=1 // pred_fallthru
      _
    %64 = sfence
    %v66 = vld [vmem:[%s3] sm:$0xf]
    %v67 = vld [vmem:[%s3 + $0x4] sm:$0xf]
    %v68 = vld [vmem:[%s3 + $0x8] sm:$0xf]
    %v69 = vld [vmem:[%s3 + $0xc] sm:$0xf]
    %v70 = vld [vmem:[%s0] sm:$0xf]
    %v71 = vld [vmem:[%s0 + $0x4] sm:$0xf]
    %v72 = vld [vmem:[%s4] sm:$0xff]
    %v73 = vld [vmem:[%s4 + $0x8] sm:$0xff]
    %v74 = vld [vmem:[%s4 + $0x10] sm:$0xff]
    %v75 = vld [vmem:[%s4 + $0x18] sm:$0xff]
    %77 = vset.pattern.permute.xlu0 0
    %78 = vperm.xlu0 %77, %v72
    %v79 = vpop.permute.xlu0 %78
    %82 = vset.pattern.permute.xlu0 0
    %83 = vperm.xlu0 %82, %v73
    %v84 = vpop.permute.xlu0 %83
    %87 = vset.pattern.permute.xlu0 0
    %88 = vperm.xlu0 %87, %v74
    %v89 = vpop.permute.xlu0 %88
    %92 = vset.pattern.permute.xlu0 0
    %93 = vperm.xlu0 %92, %v75
    %v94 = vpop.permute.xlu0 %93
    %v100 = vunpack.c.l.b16 %v66
    %v101 = vunpack.c.l.b16 %v67
    %v102 = vunpack.c.l.b16 %v68
    %v103 = vunpack.c.l.b16 %v69
    %v104 = vpack.c.b16 %v101, %v100
    %v105 = vpack.c.b16 %v103, %v102
    %v108 = vunpack.c.l.b16 %v70
    %v109 = vunpack.c.l.b16 %v71
    %v110 = vpack.c.b16 %v109, %v108
    %vm112 = vcmask 130048
    %v114 = vsel %vm112, %v104, 0
    %v117 = vsel %vm112, %v105, 0
    %119 = vmatpush.bf16.msra.mxu0 0
    %120 = vmatpush.bf16.msra.mxu0 0
    %121 = vmatpush.bf16.msra.mxu0 0
    %122 = vmatpush.bf16.msra.mxu0 0
    %123 = vmatpush.bf16.msra.mxu0 0
    %124 = vmatpush.bf16.msra.mxu0 0
    %125 = vmatpush.bf16.msra.mxu0 0
    %126 = vmatpush.bf16.msra.mxu0 %v110
    %127 = vmatmul.bf16.gmra.mxu0 %v114
    %v128 = vpop.f32.mrf.mxu0
    %v129 = vadd.f32 %v79, %v128
    %v130 = vpop.f32.mrf.mxu0
    %v131 = vadd.f32 %v84, %v130
    %132 = vmatmul.bf16.gmra.mxu0 %v117
    %v133 = vpop.f32.mrf.mxu0
    %v134 = vadd.f32 %v89, %v133
    %v135 = vpop.f32.mrf.mxu0
    %v136 = vadd.f32 %v94, %v135
    %137 = vdwg.mxu0
    %v138 = vpack.c.bf16 %v131, %v129
    %v139 = vpack.c.bf16 %v136, %v134
    %v140 = vld [vmem:[%s1] sm:$0xf]
    %v141 = vld [vmem:[%s1 + $0x4] sm:$0xf]
    %v142 = vld [vmem:[%s1 + $0x8] sm:$0xf]
    %v143 = vld [vmem:[%s1 + $0xc] sm:$0xf]
    %v144 = vld [vmem:[%s1 + $0x10] sm:$0xf]
    %v145 = vld [vmem:[%s1 + $0x14] sm:$0xf]
    %v146 = vld [vmem:[%s1 + $0x18] sm:$0xf]
    %v147 = vld [vmem:[%s1 + $0x1c] sm:$0xf]
    %v148 = vld [vmem:[%s1 + $0x20] sm:$0xf]
    %v149 = vld [vmem:[%s1 + $0x24] sm:$0xf]
    %v150 = vld [vmem:[%s1 + $0x28] sm:$0xf]
    %v151 = vld [vmem:[%s1 + $0x2c] sm:$0xf]
    %v152 = vld [vmem:[%s1 + $0x30] sm:$0xf]
    %v153 = vld [vmem:[%s1 + $0x34] sm:$0xf]
    %v154 = vld [vmem:[%s1 + $0x38] sm:$0xf]
    %v155 = vld [vmem:[%s1 + $0x3c] sm:$0xf]
    %v172 = vunpack.c.l.b16 %v140
    %v173 = vunpack.c.l.b16 %v141
    %v174 = vunpack.c.l.b16 %v142
    %v175 = vunpack.c.l.b16 %v143
    %v176 = vunpack.c.l.b16 %v144
    %v177 = vunpack.c.l.b16 %v145
    %v178 = vunpack.c.l.b16 %v146
    %v179 = vunpack.c.l.b16 %v147
    %v180 = vunpack.c.l.b16 %v148
    %v181 = vunpack.c.l.b16 %v149
    %v182 = vunpack.c.l.b16 %v150
    %v183 = vunpack.c.l.b16 %v151
    %v184 = vunpack.c.l.b16 %v152
    %v185 = vunpack.c.l.b16 %v153
    %v186 = vunpack.c.l.b16 %v154
    %v187 = vunpack.c.l.b16 %v155
    %v188 = vpack.c.b16 %v173, %v172
    %v189 = vpack.c.b16 %v175, %v174
    %v190 = vpack.c.b16 %v177, %v176
    %v191 = vpack.c.b16 %v179, %v178
    %v192 = vpack.c.b16 %v181, %v180
    %v193 = vpack.c.b16 %v183, %v182
    %v194 = vpack.c.b16 %v185, %v184
    %v195 = vpack.c.b16 %v187, %v186
    %204 = vmatpush.bf16.msra.mxu0 %v195
    %205 = vmatpush.bf16.msra.mxu0 %v194
    %206 = vmatpush.bf16.msra.mxu0 %v193
    %207 = vmatpush.bf16.msra.mxu0 %v192
    %208 = vmatpush.bf16.msra.mxu0 %v191
    %209 = vmatpush.bf16.msra.mxu0 %v190
    %210 = vmatpush.bf16.msra.mxu0 %v189
    %211 = vmatpush.bf16.msra.mxu0 %v188
    %212 = vmatmul.bf16.gmra.mxu0 %v138
    %v213 = vpop.f32.mrf.mxu0
    %v214 = vadd.f32 0.0, %v213
    %v215 = vpop.f32.mrf.mxu0
    %v216 = vadd.f32 0.0, %v215
    %217 = vmatmul.bf16.gmra.mxu0 %v139
    %v218 = vpop.f32.mrf.mxu0
    %v219 = vadd.f32 0.0, %v218
    %v220 = vpop.f32.mrf.mxu0
    %v221 = vadd.f32 0.0, %v220
    %222 = vdwg.mxu0
    %s223 = sld [smem:[#allocation6]]
    %v224 = vstv %s223
    %v225 = vmul.f32 %v224, %v129
    %v226 = vmul.f32 %v224, %v131
    %v227 = vmul.f32 %v224, %v134
    %v228 = vmul.f32 %v224, %v136
    %s229 = sld [smem:[#allocation6 + $0x1]]
    %v230 = vstv %s229
    %v231 = vmul.f32 %v230, %v214
    %v232 = vmul.f32 %v230, %v216
    %v233 = vmul.f32 %v230, %v219
    %v234 = vmul.f32 %v230, %v221
    %v235 = vadd.f32 %v225, %v231
    %v236 = vadd.f32 %v226, %v232
    %v237 = vadd.f32 %v227, %v233
    %v238 = vadd.f32 %v228, %v234
    %v239 = vld [vmem:[%s5] sm:$0xf]
    %v240 = vld [vmem:[%s5 + $0x4] sm:$0xf]
    %v241 = vld [vmem:[%s5 + $0x8] sm:$0xf]
    %v242 = vld [vmem:[%s5 + $0xc] sm:$0xf]
    %v243 = vpack.c.bf16 %v236, %v235
    %v244 = vpack.c.bf16 %v238, %v237
    %v245 = vld [vmem:[%s6] sm:$0xff]
    %v246 = vld [vmem:[%s6 + $0x8] sm:$0xff]
    %v247 = vld [vmem:[%s6 + $0x10] sm:$0xff]
    %v248 = vld [vmem:[%s6 + $0x18] sm:$0xff]
    %250 = vset.pattern.permute.xlu0 0
    %251 = vperm.xlu0 %250, %v245
    %v252 = vpop.permute.xlu0 %251
    %255 = vset.pattern.permute.xlu0 0
    %256 = vperm.xlu0 %255, %v246
    %v257 = vpop.permute.xlu0 %256
    %260 = vset.pattern.permute.xlu0 0
    %261 = vperm.xlu0 %260, %v247
    %v262 = vpop.permute.xlu0 %261
    %265 = vset.pattern.permute.xlu0 0
    %266 = vperm.xlu0 %265, %v248
    %v267 = vpop.permute.xlu0 %266
    %v273 = vunpack.c.l.b16 %v239
    %v274 = vunpack.c.l.b16 %v240
    %v275 = vunpack.c.l.b16 %v241
    %v276 = vunpack.c.l.b16 %v242
    %v277 = vpack.c.b16 %v274, %v273
    %v278 = vpack.c.b16 %v276, %v275
    %vm279 = vcmask 261120
    %v281 = vsel %vm279, %v277, 0
    %v284 = vsel %vm279, %v278, 0
    %286 = vmatpush.bf16.msra.mxu0 0
    %287 = vmatpush.bf16.msra.mxu0 0
    %288 = vmatpush.bf16.msra.mxu0 0
    %289 = vmatpush.bf16.msra.mxu0 0
    %290 = vmatpush.bf16.msra.mxu0 0
    %291 = vmatpush.bf16.msra.mxu0 0
    %292 = vmatpush.bf16.msra.mxu0 %v244
    %293 = vmatpush.bf16.msra.mxu0 %v243
    %294 = vmatmul.bf16.gmra.mxu0 %v281
    %v295 = vpop.f32.mrf.mxu0
    %v296 = vadd.f32 %v252, %v295
    %v297 = vpop.f32.mrf.mxu0
    %v298 = vadd.f32 %v257, %v297
    %299 = vmatmul.bf16.gmra.mxu0 %v284
    %v300 = vpop.f32.mrf.mxu0
    %v301 = vadd.f32 %v262, %v300
    %v302 = vpop.f32.mrf.mxu0
    %v303 = vadd.f32 %v267, %v302
    %304 = vdwg.mxu0
    %v305 = vmax.f32 %v296, 0.0
    %v306 = vmax.f32 %v298, 0.0
    %v307 = vmax.f32 %v301, 0.0
    %v308 = vmax.f32 %v303, 0.0
    %v309 = vpack.c.bf16 %v306, %v305
    %v310 = vpack.c.bf16 %v308, %v307
    %v311 = vld [vmem:[#allocation2] sm:$0xf]
    %v312 = vld [vmem:[#allocation2 + $0x4] sm:$0xf]
    %v313 = vld [vmem:[#allocation2 + $0x8] sm:$0xf]
    %v314 = vld [vmem:[#allocation2 + $0xc] sm:$0xf]
    %v315 = vld [vmem:[#allocation2 + $0x10] sm:$0xf]
    %v316 = vld [vmem:[#allocation2 + $0x14] sm:$0xf]
    %v317 = vld [vmem:[#allocation2 + $0x18] sm:$0xf]
    %v318 = vld [vmem:[#allocation2 + $0x1c] sm:$0xf]
    %v319 = vld [vmem:[#allocation2 + $0x20] sm:$0xf]
    %v320 = vld [vmem:[#allocation2 + $0x24] sm:$0xf]
    %v321 = vld [vmem:[#allocation2 + $0x28] sm:$0xf]
    %v322 = vld [vmem:[#allocation2 + $0x2c] sm:$0xf]
    %v323 = vld [vmem:[#allocation2 + $0x30] sm:$0xf]
    %v324 = vld [vmem:[#allocation2 + $0x34] sm:$0xf]
    %v325 = vld [vmem:[#allocation2 + $0x38] sm:$0xf]
    %v326 = vld [vmem:[#allocation2 + $0x3c] sm:$0xf]
    %v343 = vunpack.c.l.b16 %v311
    %v344 = vunpack.c.l.b16 %v312
    %v345 = vunpack.c.l.b16 %v313
    %v346 = vunpack.c.l.b16 %v314
    %v347 = vunpack.c.l.b16 %v315
    %v348 = vunpack.c.l.b16 %v316
    %v349 = vunpack.c.l.b16 %v317
    %v350 = vunpack.c.l.b16 %v318
    %v351 = vunpack.c.l.b16 %v319
    %v352 = vunpack.c.l.b16 %v320
    %v353 = vunpack.c.l.b16 %v321
    %v354 = vunpack.c.l.b16 %v322
    %v355 = vunpack.c.l.b16 %v323
    %v356 = vunpack.c.l.b16 %v324
    %v357 = vunpack.c.l.b16 %v325
    %v358 = vunpack.c.l.b16 %v326
    %v359 = vpack.c.b16 %v344, %v343
    %v360 = vpack.c.b16 %v346, %v345
    %v361 = vpack.c.b16 %v348, %v347
    %v362 = vpack.c.b16 %v350, %v349
    %v363 = vpack.c.b16 %v352, %v351
    %v364 = vpack.c.b16 %v354, %v353
    %v365 = vpack.c.b16 %v356, %v355
    %v366 = vpack.c.b16 %v358, %v357
    %375 = vmatpush.bf16.msra.mxu0 %v366
    %376 = vmatpush.bf16.msra.mxu0 %v365
    %377 = vmatpush.bf16.msra.mxu0 %v364
    %378 = vmatpush.bf16.msra.mxu0 %v363
    %379 = vmatpush.bf16.msra.mxu0 %v362
    %380 = vmatpush.bf16.msra.mxu0 %v361
    %381 = vmatpush.bf16.msra.mxu0 %v360
    %382 = vmatpush.bf16.msra.mxu0 %v359
    %383 = vmatmul.bf16.gmra.mxu0 %v309
    %v384 = vpop.f32.mrf.mxu0
    %v385 = vadd.f32 0.0, %v384
    %v386 = vpop.f32.mrf.mxu0
    %v387 = vadd.f32 0.0, %v386
    %388 = vmatmul.bf16.gmra.mxu0 %v310
    %v389 = vpop.f32.mrf.mxu0
    %v390 = vadd.f32 0.0, %v389
    %v391 = vpop.f32.mrf.mxu0
    %v392 = vadd.f32 0.0, %v391
    %393 = vdwg.mxu0
    %v394 = vld [vmem:[%s7] sm:$0x3]
    %v395 = vpack.c.bf16 %v387, %v385
    %v396 = vpack.c.bf16 %v392, %v390
    %v397 = vld [vmem:[%s8] sm:$0xf]
    %399 = vset.pattern.permute.xlu0 0
    %400 = vperm.xlu0 %399, %v397
    %v401 = vpop.permute.xlu0 %400
    %v404 = vsel %vm279, %v394, 0
    %406 = vmatpush.bf16.msra.mxu0 0
    %407 = vmatpush.bf16.msra.mxu0 0
    %408 = vmatpush.bf16.msra.mxu0 0
    %409 = vmatpush.bf16.msra.mxu0 0
    %410 = vmatpush.bf16.msra.mxu0 0
    %411 = vmatpush.bf16.msra.mxu0 0
    %412 = vmatpush.bf16.msra.mxu0 %v396
    %413 = vmatpush.bf16.msra.mxu0 %v395
    %414 = vmatmul.bf16.gmra.mxu0 %v404
    %v415 = vpop.f32.mrf.mxu0
    %v416 = vadd.f32 %v401, %v415
    %v417 = vpop.f32.mrf.mxu0
    %418 = vdwg.mxu0
    %vm419 = vcmask 1043456
    %v420 = vsel %vm419, %v416, -inf
    %v421 = vrot.slane %v420, 4
    %v422 = vmax.f32 %v420, %v421
    %v423 = vrot.slane %v422, 2
    %v424 = vmax.f32 %v422, %v423
    %v425 = vrot.slane %v424, 1
    %v426 = vmax.f32 %v424, %v425
    %v427 = vsub.f32 %v416, %v426
    %v428 = vmul.f32 %v427, 1.442695
    %v429 = vpow.pop %v428
    %v430 = vsel %vm419, %v429, 0.0
    %v431 = vrot.slane %v430, 4
    %v432 = vadd.f32 %v430, %v431
    %v433 = vrot.slane %v432, 2
    %v434 = vadd.f32 %v432, %v433
    %v435 = vrot.slane %v434, 1
    %v436 = vadd.f32 %v434, %v435
    %v437 = vlog2.pop %v436
    %v438 = vmul.f32 %v437, 0.6931472
    %v439 = vsub.f32 %v427, %v438
    %440 = vst [vmem:[#allocation7] sm:$0xf] %v439
    // Predicated region
    $region50: #{tpu_custom_call.1} parent=1 // pred_check
      _
    $region51: #{tpu_custom_call.1} parent=1 // pred_check_branch
      %442 = sbr.rel (0) target = $region53
    $region52: #{tpu_custom_call.1} parent=1 // pred_region
      %444 = vsyncadd [#allocation4], 0
      %s446 = sshll.u32 [#allocation7], 4
      %s447 = int_to_ptr.vmem [resolvable:$true] %s446
      %s448 = sshll.u32 %s10, 4
      %s449 = int_to_ptr.hbm [resolvable:$true] %s448
      %451 = dma.vmem_to_hbm [thread:$0]  %s447, 64, %s449, [#allocation4]
    $region53: #{tpu_custom_call.1} parent=1 // pred_fallthru
      _
    // Predicated region
    $region54: #{tpu_custom_call.1} parent=1 // pred_check
      _
    $region55: #{tpu_custom_call.1} parent=1 // pred_check_branch
      %453 = sbr.rel (0) target = $region57
    $region56: #{tpu_custom_call.1} parent=1 // pred_region
      %455 = dma.done [#allocation4], 64
    $region57: #{tpu_custom_call.1} parent=1 // pred_fallthru
      _
    %456 = vsyncpa [#allocation3], 1
    %457 = vsyncpa [#allocation4], 1
    %458 = vsyncpa [#allocation5], 1

</llo_original>
